<compile_context>
chip_gen: v6e
topology: v6e:2x2x1
jax: 0.10.0
libtpu: 0.0.40
codegen_flags: <defaults>
</compile_context>

<pallas_src>
import functools
import math

import jax
import jax.numpy as jnp
import numpy as np
from jax.experimental import pallas as pl
from jax.experimental.pallas import tpu as pltpu


# ----------------------------------------------------------------------------
# Tile picking: largest divisor of `dim` that is <= `target` and a multiple of
# `granule` (8 for sublane-dims, 128 for lane-dims).  Falls back to the full
# dimension only if no such divisor exists (then "full dim" keeps the
# (8,128)-or-full-dim block rule satisfied).
# ----------------------------------------------------------------------------
def _pick_tile(dim, target, granule):
    if dim <= target:
        return dim
    upper = min(target, dim)
    start = upper - (upper % granule)
    for cand in range(start, granule - 1, -granule):
        if cand > 0 and dim % cand == 0:
            return cand
    # TODO(synk): pad-and-mask instead of full-dim fallback for pathological dims.
    return dim


def _kv_blockspec(block_shape, index_map, buffers=3):
    """BlockSpec with N-deep pipelining for the fast-changing k/v streams."""
    try:
        return pl.BlockSpec(block_shape, index_map,
                            pipeline_mode=pl.Buffered(buffers))
    except (AttributeError, TypeError):
        return pl.BlockSpec(block_shape, index_map)


# ----------------------------------------------------------------------------
# Kernel 1a: Linear with the whole K dimension in one block (GPT-2 case).
# No accumulator scratch, no K grid axis, no init/finalize branches.
# ----------------------------------------------------------------------------
def linear_fullk_kernel(x_ref, w_ref, b_ref, o_ref):
    acc = jnp.dot(x_ref[...], w_ref[...], preferred_element_type=jnp.float32)
    o_ref[...] = (acc + b_ref[...].astype(jnp.float32)).astype(o_ref.dtype)


# ----------------------------------------------------------------------------
# Kernel 1b: K-tiled Linear with an f32 VMEM accumulator (only used for very
# large K that would not fit VMEM as a single block).
# ----------------------------------------------------------------------------
def linear_acc_kernel(x_ref, w_ref, b_ref, o_ref, acc_ref):
    @pl.when(pl.program_id(2) == 0)
    def _init():
        acc_ref[...] = jnp.zeros_like(acc_ref)

    acc_ref[...] += jnp.dot(x_ref[...], w_ref[...],
                            preferred_element_type=jnp.float32)

    @pl.when(pl.program_id(2) == pl.num_programs(2) - 1)
    def _finalize():
        o_ref[...] = (acc_ref[...] + b_ref[...].astype(jnp.float32)).astype(o_ref.dtype)


def linear(x2d, w, b, *, compute_dtype=None, out_dtype=None,
           tile_m=512, tile_n=512, tile_k=512, full_k_limit=2048):
    """x2d: (M, K), w: (K, N), b: (N,) -> (M, N)."""
    M, K = x2d.shape
    N = w.shape[1]
    out_dtype = out_dtype or x2d.dtype
    if compute_dtype is not None:
        x2d = x2d.astype(compute_dtype)
        w = w.astype(compute_dtype)

    tm = _pick_tile(M, tile_m, 8)      # sublane dim
    tn = _pick_tile(N, tile_n, 128)    # lane dim
    b2d = b.reshape(1, N)

    # 32 MiB scoped VMEM: above v5e's 16 MiB default, safe under v7x's 64 MiB
    # physical VMEM; our double-buffered bf16 blocks are only a few MiB.
    cparams = dict(vmem_limit_bytes=32 * 1024 * 1024)

    if K <= full_k_limit:
        # Single-shot K (GPT-2: K = 768 / 3072 both qualify).
        return pl.pallas_call(
            linear_fullk_kernel,
            out_shape=jax.ShapeDtypeStruct((M, N), out_dtype),
            grid=(M // tm, N // tn),
            in_specs=[
                pl.BlockSpec((tm, K), lambda i, j: (i, 0)),
                pl.BlockSpec((K, tn), lambda i, j: (0, j)),
                pl.BlockSpec((1, tn), lambda i, j: (0, j)),
            ],
            out_specs=pl.BlockSpec((tm, tn), lambda i, j: (i, j)),
            compiler_params=pltpu.CompilerParams(
                dimension_semantics=("parallel", "parallel"), **cparams),
        )(x2d, w, b2d)

    tk = _pick_tile(K, tile_k, 128)
    return pl.pallas_call(
        linear_acc_kernel,
        out_shape=jax.ShapeDtypeStruct((M, N), out_dtype),
        grid=(M // tm, N // tn, K // tk),
        in_specs=[
            pl.BlockSpec((tm, tk), lambda i, j, k: (i, k)),
            pl.BlockSpec((tk, tn), lambda i, j, k: (k, j)),
            pl.BlockSpec((1, tn), lambda i, j, k: (0, j)),
        ],
        out_specs=pl.BlockSpec((tm, tn), lambda i, j, k: (i, j)),
        scratch_shapes=[pltpu.VMEM((tm, tn), jnp.float32)],
        compiler_params=pltpu.CompilerParams(
            dimension_semantics=("parallel", "parallel", "arbitrary"), **cparams),
    )(x2d, w, b2d)


# ----------------------------------------------------------------------------
# Kernel 2: flash-style causal attention on the fused qkv tensor.
#   grid = (B, Tq_tiles, Tkv_tiles).  q/k/v arrive as (1, tile, C) lane-dense
#   slabs (heads packed along C, sliced inside the kernel); output is written
#   directly in (B, T, C) layout — no head transposes anywhere.
# ----------------------------------------------------------------------------
def flash_attn_kernel(q_ref, k_ref, v_ref, o_ref, m_sc, l_sc, acc_sc,
                      *, n_head, head_dim, tq, tk, scale):
    qi = pl.program_id(1)
    ki = pl.program_id(2)
    q_start = qi * tq
    kv_start = ki * tk

    @pl.when(ki == 0)
    def _init():
        m_sc[...] = jnp.full_like(m_sc, -jnp.inf)
        l_sc[...] = jnp.zeros_like(l_sc)
        acc_sc[...] = jnp.zeros_like(acc_sc)

    def process(apply_mask):
        if apply_mask:
            # Built once per (q_tile, kv_tile) block, shared across heads.
            row = q_start + jax.lax.broadcasted_iota(jnp.int32, (tq, tk), 0)
            col = kv_start + jax.lax.broadcasted_iota(jnp.int32, (tq, tk), 1)
            keep = col <= row
        for h in range(n_head):
            sl = pl.ds(h * head_dim, head_dim)
            # Fold 1/sqrt(Dh) into q: tq*Dh VPU multiplies instead of tq*tk.
            qh = q_ref[0, :, sl] * scale        # (tq, Dh), compute dtype
            kh = k_ref[0, :, sl]                # (tk, Dh)
            vh = v_ref[0, :, sl]                # (tk, Dh)

            # QK^T without an explicit transpose (contract last dims); f32 scores.
            s = jax.lax.dot_general(
                qh, kh, (((1,), (1,)), ((), ())),
                preferred_element_type=jnp.float32)                 # (tq, tk)
            if apply_mask:
                # Large finite negative (scores are f32) instead of -inf.
                s = jnp.where(keep, s, -1e30)

            m_prev = m_sc[h]                                        # (tq, 1)
            m_new = jnp.maximum(m_prev, jnp.max(s, axis=-1, keepdims=True))
            alpha = jnp.exp(m_prev - m_new)                         # (tq, 1)
            p = jnp.exp(s - m_new)                                  # (tq, tk)
            l_sc[h] = alpha * l_sc[h] + jnp.sum(p, axis=-1, keepdims=True)

            pv = jax.lax.dot_general(
                p.astype(vh.dtype), vh, (((1,), (0,)), ((), ())),
                preferred_element_type=jnp.float32)                 # (tq, Dh)
            acc_sc[:, sl] = alpha * acc_sc[:, sl] + pv
            m_sc[h] = m_new

    # Fully unmasked (strictly below the diagonal): no mask work at all.
    @pl.when(kv_start + tk - 1 <= q_start)
    def _interior():
        process(apply_mask=False)

    # Diagonal-straddling tile: apply the causal mask.
    @pl.when(jnp.logical_and(kv_start <= q_start + tq - 1,
                             kv_start + tk - 1 > q_start))
    def _diagonal():
        process(apply_mask=True)

    # Fully masked tiles (kv_start > q_end): no compute and (thanks to the
    # clamped k/v index maps) no DMA either.

    @pl.when(ki == pl.num_programs(2) - 1)
    def _finalize():
        for h in range(n_head):
            sl = pl.ds(h * head_dim, head_dim)
            inv = pl.reciprocal(l_sc[h], approx=True)               # (tq, 1)
            acc_sc[:, sl] = acc_sc[:, sl] * inv
        o_ref[0] = acc_sc[...].astype(o_ref.dtype)                  # lane-dense (tq, C)


def flash_causal_attention(qkv, n_head, *, q_tile=128, kv_tile=256,
                           out_dtype=None):
    """qkv: (B, T, 3C) fused projection output -> attention output (B, T, C)."""
    B, T, threeC = qkv.shape
    C = threeC // 3
    head_dim = C // n_head
    out_dtype = out_dtype or qkv.dtype
    tq = _pick_tile(T, q_tile, 8)
    tk = _pick_tile(T, kv_tile, 8)
    scale = 1.0 / math.sqrt(head_dim)

    # Clamp the kv block index to the last block this q tile actually needs:
    # the pipeline sees a repeated block index on fully-masked steps and skips
    # the DMA (pl.when skips the compute).
    def kv_block(qi, ki):
        return jnp.minimum(ki, (qi * tq + tq - 1) // tk)

    if C % 128 == 0:
        # Fused path: pass qkv three times; last-dim block index 0/1/2 selects
        # q / k / v — no slice copies, no extra HBM pass over qkv.
        q_spec = pl.BlockSpec((1, tq, C), lambda b, qi, ki: (b, qi, 0))
        k_spec = _kv_blockspec((1, tk, C),
                               lambda b, qi, ki: (b, kv_block(qi, ki), 1))
        v_spec = _kv_blockspec((1, tk, C),
                               lambda b, qi, ki: (b, kv_block(qi, ki), 2))
        operands = (qkv, qkv, qkv)
    else:
        # Tiny / non-128-aligned C: lane blocks of width C would violate the
        # (8,128) rule on the 3C axis, so fall back to materialized slices.
        q = jax.lax.slice_in_dim(qkv, 0, C, axis=2)
        k = jax.lax.slice_in_dim(qkv, C, 2 * C, axis=2)
        v = jax.lax.slice_in_dim(qkv, 2 * C, 3 * C, axis=2)
        q_spec = pl.BlockSpec((1, tq, C), lambda b, qi, ki: (b, qi, 0))
        k_spec = _kv_blockspec((1, tk, C),
                               lambda b, qi, ki: (b, kv_block(qi, ki), 0))
        v_spec = _kv_blockspec((1, tk, C),
                               lambda b, qi, ki: (b, kv_block(qi, ki), 0))
        operands = (q, k, v)

    kernel = functools.partial(
        flash_attn_kernel, n_head=n_head, head_dim=head_dim,
        tq=tq, tk=tk, scale=scale)

    return pl.pallas_call(
        kernel,
        out_shape=jax.ShapeDtypeStruct((B, T, C), out_dtype),
        grid=(B, T // tq, T // tk),
        in_specs=[q_spec, k_spec, v_spec],
        out_specs=pl.BlockSpec((1, tq, C), lambda b, qi, ki: (b, qi, 0)),
        scratch_shapes=[
            pltpu.VMEM((n_head, tq, 1), jnp.float32),   # running max m
            pltpu.VMEM((n_head, tq, 1), jnp.float32),   # running denom l
            pltpu.VMEM((tq, C), jnp.float32),           # output accumulator
        ],
        compiler_params=pltpu.CompilerParams(
            dimension_semantics=("parallel", "parallel", "arbitrary"),
            vmem_limit_bytes=32 * 1024 * 1024,
        ),
    )(*operands)


# ----------------------------------------------------------------------------
# Full module forward.
# ----------------------------------------------------------------------------
def causal_self_attention(x, w_attn, b_attn, w_proj, b_proj, n_head,
                          *, compute_dtype=jnp.bfloat16):
    """x: (B, T, C).  Weights stored as (in, out) so y = x @ W + b matches
    PyTorch's x @ W.T + b with W_torch = W.T.

    compute_dtype: matmul-operand dtype.  Default bf16 (MXU peak + halved
    HBM/VMEM traffic on v5e/v6e/v7x); softmax statistics and all accumulation
    stay f32.  Pass jnp.float32 for closest parity with the PyTorch module.
    """
    B, T, C = x.shape
    out_dtype = x.dtype
    cdt = compute_dtype if compute_dtype is not None else x.dtype

    # Fused c_attn: (B*T, C) @ (C, 3C) + b.  Output kept in compute dtype.
    qkv = linear(x.reshape(B * T, C), w_attn, b_attn,
                 compute_dtype=cdt, out_dtype=cdt).reshape(B, T, 3 * C)

    # Attention consumes the fused qkv directly (no q/k/v slice copies) and
    # writes its output lane-dense in (B, T, C) layout.
    y = flash_causal_attention(qkv, n_head, out_dtype=cdt)

    return linear(y.reshape(B * T, C), w_proj, b_proj,
                  compute_dtype=cdt, out_dtype=out_dtype).reshape(B, T, C)


# Pure-JAX reference for correctness cross-checks.
def reference(x, w_attn, b_attn, w_proj, b_proj, n_head):
    B, T, C = x.shape
    hd = C // n_head
    qkv = x @ w_attn + b_attn
    q, k, v = jnp.split(qkv, 3, axis=2)
    q = q.reshape(B, T, n_head, hd).transpose(0, 2, 1, 3)
    k = k.reshape(B, T, n_head, hd).transpose(0, 2, 1, 3)
    v = v.reshape(B, T, n_head, hd).transpose(0, 2, 1, 3)
    s = jnp.einsum("bhqd,bhkd->bhqk", q, k) / math.sqrt(hd)
    mask = jnp.tril(jnp.ones((T, T), dtype=bool))
    s = jnp.where(mask, s, -jnp.inf)
    p = jax.nn.softmax(s, axis=-1)
    y = jnp.einsum("bhqk,bhkd->bhqd", p, v)
    y = y.transpose(0, 2, 1, 3).reshape(B, T, C)
    return y @ w_proj + b_proj


def _make_params(key, C):
    k1, k2, k3, k4 = jax.random.split(key, 4)
    w_attn = jax.random.normal(k1, (C, 3 * C), dtype=jnp.float32) * 0.02
    b_attn = jax.random.normal(k2, (3 * C,), dtype=jnp.float32) * 0.02
    w_proj = jax.random.normal(k3, (C, C), dtype=jnp.float32) * 0.02
    b_proj = jax.random.normal(k4, (C,), dtype=jnp.float32) * 0.02
    return w_attn, b_attn, w_proj, b_proj


# TODO(synk): attention / residual dropout from the training-mode module is not
# implemented (inference/eval semantics only).

if __name__ == "__main__":
    key = jax.random.PRNGKey(0)

    # ---- Small config matching the module spec: n_embd=32, n_head=4, B=2, T=8.
    B, T, C, n_head = 2, 8, 32, 4
    kx, kp = jax.random.split(key)
    x = jax.random.normal(kx, (B, T, C), dtype=jnp.float32)
    w_attn, b_attn, w_proj, b_proj = _make_params(kp, C)
    ref = reference(x, w_attn, b_attn, w_proj, b_proj, n_head)

    # f32 compute path: tight check against the pure-JAX reference.
    out_f32 = causal_self_attention(x, w_attn, b_attn, w_proj, b_proj, n_head,
                                    compute_dtype=jnp.float32)
    out_f32 = jax.block_until_ready(out_f32)
    np.testing.assert_allclose(np.asarray(out_f32), np.asarray(ref),
                               rtol=2e-2, atol=2e-3)

    # Default path (bf16 matmul operands, f32 stats/accumulation): looser check.
    out_bf16 = causal_self_attention(x, w_attn, b_attn, w_proj, b_proj, n_head)
    out_bf16 = jax.block_until_ready(out_bf16)
    np.testing.assert_allclose(np.asarray(out_bf16), np.asarray(ref),
                               rtol=5e-2, atol=5e-3)

    # ---- Larger config: exercises the fused-qkv lane-block path, interior /
    # diagonal / fully-masked (DMA-skipped) KV tiles, kv_tile=256 and the
    # full-K bf16 linears.
    B2, T2, C2, n_head2 = 1, 512, 256, 4
    kx2, kp2 = jax.random.split(jax.random.PRNGKey(1))
    x2 = jax.random.normal(kx2, (B2, T2, C2), dtype=jnp.float32)
    p2 = _make_params(kp2, C2)
    ref2 = reference(x2, *p2, n_head2)
    out2 = jax.block_until_ready(causal_self_attention(x2, *p2, n_head2))
    np.testing.assert_allclose(np.asarray(out2), np.asarray(ref2),
                               rtol=5e-2, atol=5e-3)

    print("KERNEL_OK")
</pallas_src>

<mosaic_0001>
module attributes {stable_mosaic.version = 11 : i64} {
  func.func @linear_fullk_kernel(%arg0: i32, %arg1: i32, %arg2: memref<16x32xf32, #tpu.memory_space<vmem>>, %arg3: memref<32x96xf32, #tpu.memory_space<vmem>>, %arg4: memref<1x96xf32, #tpu.memory_space<vmem>>, %arg5: memref<16x96xf32, #tpu.memory_space<vmem>>) attributes {dimension_semantics = [#tpu.dimension_semantics<parallel>, #tpu.dimension_semantics<parallel>], iteration_bounds = array<i64: 1, 1>, scalar_prefetch = 0 : i64, scratch_operands = 0 : i64, tpu.core_type = #tpu.core_type<tc>, window_params = [{transform_indices = @transform_0, window_bounds = array<i64: 16, 32>}, {transform_indices = @transform_1, window_bounds = array<i64: 32, 96>}, {transform_indices = @transform_2, window_bounds = array<i64: 1, 96>}, {transform_indices = @transform_3, window_bounds = array<i64: 16, 96>}]} {
    %c0 = arith.constant 0 : index
    %c0_0 = arith.constant 0 : index
    %0 = vector.load %arg2[%c0, %c0_0] : memref<16x32xf32, #tpu.memory_space<vmem>>, vector<16x32xf32>
    %c0_1 = arith.constant 0 : index
    %c0_2 = arith.constant 0 : index
    %1 = vector.load %arg3[%c0_1, %c0_2] : memref<32x96xf32, #tpu.memory_space<vmem>>, vector<32x96xf32>
    %cst = arith.constant dense<0.000000e+00> : vector<16x96xf32>
    %2 = tpu.matmul %0, %1, %cst {dimension_numbers = #tpu.dot_dimension_numbers<[1], [0], [0], [1], [0, 0, 1, 1], [], []>} : vector<16x32xf32>, vector<32x96xf32>, vector<16x96xf32> -> vector<16x96xf32>
    %c0_3 = arith.constant 0 : index
    %c0_4 = arith.constant 0 : index
    %3 = vector.load %arg4[%c0_3, %c0_4] : memref<1x96xf32, #tpu.memory_space<vmem>>, vector<1x96xf32>
    %4 = vector.broadcast %3 : vector<1x96xf32> to vector<16x96xf32>
    %5 = arith.addf %2, %4 : vector<16x96xf32>
    %c0_5 = arith.constant 0 : index
    %c0_6 = arith.constant 0 : index
    %6 = vector.load %arg5[%c0_5, %c0_6] : memref<16x96xf32, #tpu.memory_space<vmem>>, vector<16x96xf32>
    tpu.vector_store %arg5[%c0_5, %c0_6], %5 {strides = array<i32>} : memref<16x96xf32, #tpu.memory_space<vmem>>, vector<16x96xf32>,
    return
  }
  func.func @transform_0(%arg0: i32, %arg1: i32) -> (i32, i32) {
    %c0_i32 = arith.constant 0 : i32
    %c0_i32_0 = arith.constant 0 : i32
    return %arg0, %c0_i32 : i32, i32
  }
  func.func @transform_1(%arg0: i32, %arg1: i32) -> (i32, i32) {
    %c0_i32 = arith.constant 0 : i32
    %c0_i32_0 = arith.constant 0 : i32
    return %c0_i32, %arg1 : i32, i32
  }
  func.func @transform_2(%arg0: i32, %arg1: i32) -> (i32, i32) {
    %c0_i32 = arith.constant 0 : i32
    %c0_i32_0 = arith.constant 0 : i32
    return %c0_i32, %arg1 : i32, i32
  }
  func.func @transform_3(%arg0: i32, %arg1: i32) -> (i32, i32) {
    %c0_i32 = arith.constant 0 : i32
    return %arg0, %arg1 : i32, i32
  }
}

</mosaic_0001>

<llo_original>
// kernel: tpu_custom_call.1
$region0: #{tpu_custom_call.1}
  #allocation0 [shape = 'u32[]', space=smem, size = 0x4, offset = 0x4, fixed_abs, tag = 'smem constant byte address 0x4 - core index']
  #allocation1 [shape = 'u32[144,128]{1,0:T(1,128)}', space=vmem, size = 0x12000, scoped, tag = 'internal scratch']
  %s0 = inlined_call_operand.hbm [shape: f32[16,32], index: 0, kind: input, shape index: {}]
  %s1 = inlined_call_operand.hbm [shape: f32[32,96], index: 1, kind: input, shape index: {}]
  %s2 = inlined_call_operand.vmem [shape: f32[1,96], index: 2, kind: input, shape index: {}]
  %s3 = inlined_call_operand.hbm [shape: f32[16,96], index: 3, kind: output, shape index: {}]
  %s4 = sld [smem:[#allocation0]]
  $region30: #{tpu_custom_call.1} parent=0
    _
  %s6 = ssub.s32 1, %s4
  %s7 = scalar_select 0, %s6, %s4
  $region1: #{tpu_custom_call.1} parent=0
    #allocation2 [shape = 'u8[8192]{0}', space=vmem, size = 0x2000, scoped, tag = 'input window, operand 0, single buffered']
    #allocation3 [shape = 's32[1]{0}', space=sflag, size = 0x4, scoped, tag = 'scoped memory for tpu_custom_call.1']
    #allocation4 [shape = 's32[1]{0}', space=sflag, size = 0x4, scoped, tag = 'scoped memory for tpu_custom_call.1']
    #allocation5 [shape = 'u8[16384]{0}', space=vmem, size = 0x4000, scoped, tag = 'input window, operand 1, single buffered']
    #allocation6 [shape = 's32[1]{0}', space=sflag, size = 0x4, scoped, tag = 'scoped memory for tpu_custom_call.1']
    #allocation7 [shape = 'u8[8192]{0}', space=vmem, size = 0x2000, scoped, tag = 'output window, operand 0, single buffered']
    %8 = vsyncpa [#allocation3], 0
    %9 = vsyncpa [#allocation6], 0
    %10 = vsyncpa [#allocation4], 0
    // Predicated region
    $region2: #{tpu_custom_call.1} parent=1 // pred_check
      _
    $region3: #{tpu_custom_call.1} parent=1 // pred_check_branch
      %12 = sbr.rel (0) target = $region5
    $region4: #{tpu_custom_call.1} parent=1 // pred_region
      %s14 = ssub.s32 256, 256
      %15 = vsyncadd [#allocation3], %s14
      %s16 = sshll.u32 [#allocation2], 4
      %s17 = int_to_ptr.vmem [resolvable:$true] %s16
      %22 = dma.hbm_to_vmem [thread:$0]  %s0, 256, %s17, [#allocation3], 128, 128, 8
    $region5: #{tpu_custom_call.1} parent=1 // pred_fallthru
      _
    // Predicated region
    $region6: #{tpu_custom_call.1} parent=1 // pred_check
      _
    $region7: #{tpu_custom_call.1} parent=1 // pred_check_branch
      %24 = sbr.rel (0) target = $region9
    $region8: #{tpu_custom_call.1} parent=1 // pred_region
      %s26 = ssub.s32 512, 512
      %27 = vsyncadd [#allocation6], %s26
      %s28 = sshll.u32 [#allocation5], 4
      %s29 = int_to_ptr.vmem [resolvable:$true] %s28
      %34 = dma.hbm_to_vmem [thread:$0]  %s1, 512, %s29, [#allocation6], 128, 128, 8
    $region9: #{tpu_custom_call.1} parent=1 // pred_fallthru
      _
    // Predicated region
    $region10: #{tpu_custom_call.1} parent=1 // pred_check
      _
    $region11: #{tpu_custom_call.1} parent=1 // pred_check_branch
      %36 = sbr.rel (0) target = $region13
    $region12: #{tpu_custom_call.1} parent=1 // pred_region
      _
    $region13: #{tpu_custom_call.1} parent=1 // pred_fallthru
      _
    // Predicated region
    $region14: #{tpu_custom_call.1} parent=1 // pred_check
      _
    $region15: #{tpu_custom_call.1} parent=1 // pred_check_branch
      %38 = sbr.rel (0) target = $region17
    $region16: #{tpu_custom_call.1} parent=1 // pred_region
      %39 = dma.done [#allocation3], 256
    $region17: #{tpu_custom_call.1} parent=1 // pred_fallthru
      _
    // Predicated region
    $region18: #{tpu_custom_call.1} parent=1 // pred_check
      _
    $region19: #{tpu_custom_call.1} parent=1 // pred_check_branch
      %41 = sbr.rel (0) target = $region21
    $region20: #{tpu_custom_call.1} parent=1 // pred_region
      %42 = dma.done [#allocation6], 512
    $region21: #{tpu_custom_call.1} parent=1 // pred_fallthru
      _
    %v43 = vld [vmem:[#allocation2] sm:$0xff]
    %v44 = vld [vmem:[#allocation2 + $0x8] sm:$0xff]
    %v45 = vld [vmem:[#allocation5] sm:$0xff]
    %v46 = vld [vmem:[#allocation5 + $0x8] sm:$0xff]
    %v47 = vld [vmem:[#allocation5 + $0x10] sm:$0xff]
    %v48 = vld [vmem:[#allocation5 + $0x18] sm:$0xff]
    %v49 = vld [vmem:[%s2] sm:$0x1]
    %v51 = vlaneseq
    %v52 = vshrl.u32 %v51, 7
    %v53 = vsub.s32 0, %v52
    %v54 = vrot.slane %v49, %v53
    %vm56 = vcmask 261120
    %v58 = vsel %vm56, %v43, 0
    %v61 = vsel %vm56, %v44, 0
    %63 = vmatprep.subr.mxu0 0.0
    %64 = vmatpush1.msra.mxu0 0.0
    %65 = vmatprep.subr.mxu0 0.0
    %66 = vmatpush1.msra.mxu0 0.0
    %67 = vmatprep.subr.mxu0 0.0
    %68 = vmatpush1.msra.mxu0 0.0
    %69 = vmatprep.subr.mxu0 0.0
    %70 = vmatpush1.msra.mxu0 0.0
    %71 = vmatprep.subr.mxu0 0.0
    %72 = vmatpush1.msra.mxu0 0.0
    %73 = vmatprep.subr.mxu0 0.0
    %74 = vmatpush1.msra.mxu0 0.0
    %75 = vmatprep.subr.mxu0 0.0
    %76 = vmatpush1.msra.mxu0 0.0
    %77 = vmatprep.subr.mxu0 0.0
    %78 = vmatpush1.msra.mxu0 0.0
    %79 = vmatprep.subr.mxu0 0.0
    %80 = vmatpush1.msra.mxu0 0.0
    %81 = vmatprep.subr.mxu0 0.0
    %82 = vmatpush1.msra.mxu0 0.0
    %83 = vmatprep.subr.mxu0 0.0
    %84 = vmatpush1.msra.mxu0 0.0
    %85 = vmatprep.subr.mxu0 0.0
    %86 = vmatpush1.msra.mxu0 0.0
    %87 = vmatprep.subr.mxu0 0.0
    %88 = vmatpush1.msra.mxu0 %v48
    %89 = vmatprep.subr.mxu0 0.0
    %90 = vmatpush1.msra.mxu0 %v47
    %91 = vmatprep.subr.mxu0 0.0
    %92 = vmatpush1.msra.mxu0 %v46
    %93 = vmatprep.subr.mxu0 0.0
    %94 = vmatpush1.msra.mxu0 %v45
    %95 = vmatprep.subr.mxu0 0.0
    %96 = vmatpush2.msra.mxu0 0.0
    %97 = vmatprep.subr.mxu0 0.0
    %98 = vmatpush2.msra.mxu0 0.0
    %99 = vmatprep.subr.mxu0 0.0
    %100 = vmatpush2.msra.mxu0 0.0
    %101 = vmatprep.subr.mxu0 0.0
    %102 = vmatpush2.msra.mxu0 0.0
    %103 = vmatprep.subr.mxu0 0.0
    %104 = vmatpush2.msra.mxu0 0.0
    %105 = vmatprep.subr.mxu0 0.0
    %106 = vmatpush2.msra.mxu0 0.0
    %107 = vmatprep.subr.mxu0 0.0
    %108 = vmatpush2.msra.mxu0 0.0
    %109 = vmatprep.subr.mxu0 0.0
    %110 = vmatpush2.msra.mxu0 0.0
    %111 = vmatprep.subr.mxu0 0.0
    %112 = vmatpush2.msra.mxu0 0.0
    %113 = vmatprep.subr.mxu0 0.0
    %114 = vmatpush2.msra.mxu0 0.0
    %115 = vmatprep.subr.mxu0 0.0
    %116 = vmatpush2.msra.mxu0 0.0
    %117 = vmatprep.subr.mxu0 0.0
    %118 = vmatpush2.msra.mxu0 0.0
    %119 = vmatprep.subr.mxu0 0.0
    %120 = vmatpush2.msra.mxu0 0.0
    %121 = vmatprep.subr.mxu0 0.0
    %122 = vmatpush2.msra.mxu0 0.0
    %123 = vmatprep.subr.mxu0 0.0
    %124 = vmatpush2.msra.mxu0 0.0
    %125 = vmatprep.subr.mxu0 0.0
    %126 = vmatpush2.msra.mxu0 0.0
    %127 = vmatprep.mubr.f32.mxu0 0.0
    %128 = vmatmul.mubr.f32.gmra.mxu0 %v58
    %v129 = vpop.f32.mrf.mxu0
    %v130 = vadd.f32 %v54, %v129
    %v131 = vpop.f32.mrf.mxu0
    %132 = vmatprep.mubr.f32.mxu0 0.0
    %133 = vmatmul.mubr.f32.gmra.mxu0 %v61
    %v134 = vpop.f32.mrf.mxu0
    %v135 = vadd.f32 %v54, %v134
    %v136 = vpop.f32.mrf.mxu0
    %137 = vdwg.mxu0
    %vm138 = vcmask 785408
    %139 = vst.msk [vmem:[#allocation7] sm:$0xff] %vm138, %v130
    %140 = vst.msk [vmem:[#allocation7 + $0x8] sm:$0xff] %vm138, %v135
    // Predicated region
    $region22: #{tpu_custom_call.1} parent=1 // pred_check
      _
    $region23: #{tpu_custom_call.1} parent=1 // pred_check_branch
      %142 = sbr.rel (0) target = $region25
    $region24: #{tpu_custom_call.1} parent=1 // pred_region
      %s144 = ssub.s32 256, 256
      %145 = vsyncadd [#allocation4], %s144
      %s146 = sshll.u32 [#allocation7], 4
      %s147 = int_to_ptr.vmem [resolvable:$true] %s146
      %152 = dma.vmem_to_hbm [thread:$0]  %s147, 256, %s3, [#allocation4], 128, 128, 8
    $region25: #{tpu_custom_call.1} parent=1 // pred_fallthru
      _
    // Predicated region
    $region26: #{tpu_custom_call.1} parent=1 // pred_check
      _
    $region27: #{tpu_custom_call.1} parent=1 // pred_check_branch
      %154 = sbr.rel (0) target = $region29
    $region28: #{tpu_custom_call.1} parent=1 // pred_region
      %155 = dma.done [#allocation4], 256
    $region29: #{tpu_custom_call.1} parent=1 // pred_fallthru
      _
    %156 = vsyncpa [#allocation3], 1
    %157 = vsyncpa [#allocation6], 1
    %158 = vsyncpa [#allocation4], 1

</llo_original>
